<compile_context>
chip_gen: v7x
topology: tpu7x:2x2x1
jax: 0.10.0
libtpu: 0.0.40
codegen_flags: <defaults>
</compile_context>

<pallas_src>
import math

import jax
import jax.numpy as jnp
from jax import lax
from jax.experimental import pallas as pl
from jax.experimental.pallas import tpu as pltpu

_LANE = 128


def _round_up(n, m):
    return ((n + m - 1) // m) * m


def _fmix32(h):
    """murmur3 finalizer: elementwise uint32 -> uint32 avalanche hash."""
    h = h ^ (h >> jnp.uint32(16))
    h = h * jnp.uint32(0x85EBCA6B)
    h = h ^ (h >> jnp.uint32(13))
    h = h * jnp.uint32(0xC2B2AE35)
    h = h ^ (h >> jnp.uint32(16))
    return h


def _bits_to_uniform(bits_u32):
    """uint32 random bits -> float32 uniform in [0, 1) (mantissa trick)."""
    mant = (bits_u32 >> jnp.uint32(9)) | jnp.uint32(0x3F800000)  # [1.0, 2.0)
    return lax.bitcast_convert_type(mant, jnp.float32) - jnp.float32(1.0)


def _randn_kernel(seed_ref, out_ref):
    tile, lanes = out_ref.shape
    half = tile // 2
    step = pl.program_id(0)

    # Globally-unique pair index per (u1, u2) draw: includes the grid step,
    # so every tile produces independent samples from the same seed.
    base = _fmix32(seed_ref[0].astype(jnp.uint32) + jnp.uint32(0x9E3779B9))
    row = lax.broadcasted_iota(jnp.int32, (half, lanes), 0).astype(jnp.uint32)
    lane = lax.broadcasted_iota(jnp.int32, (half, lanes), 1).astype(jnp.uint32)
    pair = (step.astype(jnp.uint32) * jnp.uint32(half) + row) * jnp.uint32(lanes) + lane

    b1 = _fmix32((pair * jnp.uint32(2)) ^ base)
    b2 = _fmix32((pair * jnp.uint32(2) + jnp.uint32(1)) ^ base)
    u1 = _bits_to_uniform(b1)
    u2 = _bits_to_uniform(b2)

    # Box-Muller, both outputs (1 - u1 is in (0, 1], so log never sees 0).
    r = jnp.sqrt(jnp.float32(-2.0) * jnp.log(jnp.float32(1.0) - u1))
    theta = jnp.float32(2.0 * math.pi) * u2
    z = jnp.concatenate([r * jnp.cos(theta), r * jnp.sin(theta)], axis=0)
    out_ref[...] = z.astype(out_ref.dtype)


def init_graphsage_params(key, input_dim=32, hidden_dim=64, output_dim=64):
    """Deterministic parameter init matching nn.Linear shapes (W: (out,in), b: (out,))."""
    k1, k2, k3, k4 = jax.random.split(key, 4)
    return {
        "lin1_w": jax.random.normal(k1, (hidden_dim, input_dim), jnp.float32) * 0.05,
        "lin1_b": jax.random.normal(k2, (hidden_dim,), jnp.float32) * 0.05,
        "lin2_w": jax.random.normal(k3, (output_dim, hidden_dim), jnp.float32) * 0.05,
        "lin2_b": jax.random.normal(k4, (output_dim,), jnp.float32) * 0.05,
    }


def graphsage_forward(x, edge_index, params, *, seed=0, tile_rows=512):
    """Mirrors GraphSAGEModel.forward: randn(x.shape[0], lin2.out_features).

    x, edge_index and params are accepted (same signature as the module) but,
    exactly like the PyTorch mock, they do not influence the output values.
    """
    # TODO(synk): lin1/lin2 are declared but unused in the PyTorch forward; no
    # matmul is executed here on purpose to preserve the reference semantics.
    del edge_index
    num_nodes = x.shape[0]
    output_dim = params["lin2_w"].shape[0]
    total = num_nodes * output_dim

    # Lane-dense layout: generate a (padded_rows, 128) f32 slab, tiled over rows.
    flat_rows = -(-total // _LANE)
    tile = min(int(tile_rows), _round_up(flat_rows, 8))
    tile = max(tile, 8)                      # (8, 128) tiling constraint, even for Box-Muller halves
    padded_rows = _round_up(flat_rows, tile)
    num_tiles = padded_rows // tile

    seed_arr = jnp.asarray([seed], dtype=jnp.int32)
    n_elems = padded_rows * _LANE

    out_flat = pl.pallas_call(
        _randn_kernel,
        out_shape=jax.ShapeDtypeStruct((padded_rows, _LANE), jnp.float32),
        grid=(num_tiles,),
        in_specs=[pl.BlockSpec(memory_space=pltpu.MemorySpace.SMEM)],
        out_specs=pl.BlockSpec((tile, _LANE), lambda i: (i, 0)),
        compiler_params=pltpu.CompilerParams(
            dimension_semantics=("parallel",)),
        cost_estimate=pl.CostEstimate(
            flops=20 * n_elems,
            transcendentals=3 * (n_elems // 2),   # log + cos + sin per sample pair
            bytes_accessed=4 * n_elems),
    )(seed_arr)

    return out_flat.reshape(-1)[:total].reshape(num_nodes, output_dim)


if __name__ == "__main__":
    key = jax.random.PRNGKey(0)
    kx, ke, kp = jax.random.split(key, 3)

    num_nodes, input_dim, hidden_dim, output_dim = 8, 32, 64, 64
    num_edges = 16

    x = jax.random.normal(kx, (num_nodes, input_dim), jnp.float32)
    edge_index = jax.random.randint(ke, (2, num_edges), 0, num_nodes, dtype=jnp.int32)
    params = init_graphsage_params(kp, input_dim, hidden_dim, output_dim)

    z = graphsage_forward(x, edge_index, params, seed=0)
    z = jax.block_until_ready(z)

    assert z.shape == (num_nodes, output_dim), z.shape
    assert z.dtype == jnp.float32, z.dtype
    assert bool(jnp.all(jnp.isfinite(z)))
    # Crude sanity on standard-normal statistics (512 samples).
    assert abs(float(jnp.mean(z))) < 0.5
    assert 0.5 < float(jnp.std(z)) < 1.5

    print("KERNEL_OK")
</pallas_src>

<mosaic_0001>
module attributes {stable_mosaic.version = 11 : i64} {
  func.func @_randn_kernel(%arg0: i32, %arg1: memref<1xi32, #tpu.memory_space<smem>>, %arg2: memref<8x128xf32, #tpu.memory_space<vmem>>) attributes {dimension_semantics = [#tpu.dimension_semantics<parallel>], iteration_bounds = array<i64: 1>, scalar_prefetch = 0 : i64, scratch_operands = 0 : i64, tpu.core_type = #tpu.core_type<tc>, window_params = [{transform_indices = @transform_0, window_bounds = array<i64: 1>}, {transform_indices = @transform_1, window_bounds = array<i64: 8, 128>}]} {
    %c0 = arith.constant 0 : index
    %0 = memref.load %arg1[%c0] : memref<1xi32, #tpu.memory_space<smem>>
    %c-1640531527_i32 = arith.constant -1640531527 : i32
    %1 = arith.addi %0, %c-1640531527_i32 : i32
    %c16_i32 = arith.constant 16 : i32
    %2 = arith.shrui %1, %c16_i32 : i32
    %3 = arith.xori %1, %2 : i32
    %c-2048144789_i32 = arith.constant -2048144789 : i32
    %4 = arith.muli %3, %c-2048144789_i32 : i32
    %c13_i32 = arith.constant 13 : i32
    %5 = arith.shrui %4, %c13_i32 : i32
    %6 = arith.xori %4, %5 : i32
    %c-1028477387_i32 = arith.constant -1028477387 : i32
    %7 = arith.muli %6, %c-1028477387_i32 : i32
    %c16_i32_0 = arith.constant 16 : i32
    %8 = arith.shrui %7, %c16_i32_0 : i32
    %9 = arith.xori %7, %8 : i32
    %10 = tpu.iota {dimensions = array<i32: 0>} : vector<4x128xi32>
    %11 = tpu.iota {dimensions = array<i32: 1>} : vector<4x128xi32>
    %c4_i32 = arith.constant 4 : i32
    %12 = arith.muli %arg0, %c4_i32 : i32
    %13 = vector.broadcast %12 : i32 to vector<4x128xi32>
    %14 = arith.addi %13, %10 : vector<4x128xi32>
    %c128_i32 = arith.constant 128 : i32
    %15 = vector.broadcast %c128_i32 : i32 to vector<4x128xi32>
    %16 = arith.muli %14, %15 : vector<4x128xi32>
    %17 = arith.addi %16, %11 : vector<4x128xi32>
    %c2_i32 = arith.constant 2 : i32
    %18 = vector.broadcast %c2_i32 : i32 to vector<4x128xi32>
    %19 = arith.muli %17, %18 : vector<4x128xi32>
    %20 = vector.broadcast %9 : i32 to vector<4x128xi32>
    %21 = arith.xori %19, %20 : vector<4x128xi32>
    %c16_i32_1 = arith.constant 16 : i32
    %22 = vector.broadcast %c16_i32_1 : i32 to vector<4x128xi32>
    %23 = arith.shrui %21, %22 : vector<4x128xi32>
    %24 = arith.xori %21, %23 : vector<4x128xi32>
    %c-2048144789_i32_2 = arith.constant -2048144789 : i32
    %25 = vector.broadcast %c-2048144789_i32_2 : i32 to vector<4x128xi32>
    %26 = arith.muli %24, %25 : vector<4x128xi32>
    %c13_i32_3 = arith.constant 13 : i32
    %27 = vector.broadcast %c13_i32_3 : i32 to vector<4x128xi32>
    %28 = arith.shrui %26, %27 : vector<4x128xi32>
    %29 = arith.xori %26, %28 : vector<4x128xi32>
    %c-1028477387_i32_4 = arith.constant -1028477387 : i32
    %30 = vector.broadcast %c-1028477387_i32_4 : i32 to vector<4x128xi32>
    %31 = arith.muli %29, %30 : vector<4x128xi32>
    %c16_i32_5 = arith.constant 16 : i32
    %32 = vector.broadcast %c16_i32_5 : i32 to vector<4x128xi32>
    %33 = arith.shrui %31, %32 : vector<4x128xi32>
    %34 = arith.xori %31, %33 : vector<4x128xi32>
    %c2_i32_6 = arith.constant 2 : i32
    %35 = vector.broadcast %c2_i32_6 : i32 to vector<4x128xi32>
    %36 = arith.muli %17, %35 : vector<4x128xi32>
    %c1_i32 = arith.constant 1 : i32
    %37 = vector.broadcast %c1_i32 : i32 to vector<4x128xi32>
    %38 = arith.addi %36, %37 : vector<4x128xi32>
    %39 = vector.broadcast %9 : i32 to vector<4x128xi32>
    %40 = arith.xori %38, %39 : vector<4x128xi32>
    %c16_i32_7 = arith.constant 16 : i32
    %41 = vector.broadcast %c16_i32_7 : i32 to vector<4x128xi32>
    %42 = arith.shrui %40, %41 : vector<4x128xi32>
    %43 = arith.xori %40, %42 : vector<4x128xi32>
    %c-2048144789_i32_8 = arith.constant -2048144789 : i32
    %44 = vector.broadcast %c-2048144789_i32_8 : i32 to vector<4x128xi32>
    %45 = arith.muli %43, %44 : vector<4x128xi32>
    %c13_i32_9 = arith.constant 13 : i32
    %46 = vector.broadcast %c13_i32_9 : i32 to vector<4x128xi32>
    %47 = arith.shrui %45, %46 : vector<4x128xi32>
    %48 = arith.xori %45, %47 : vector<4x128xi32>
    %c-1028477387_i32_10 = arith.constant -1028477387 : i32
    %49 = vector.broadcast %c-1028477387_i32_10 : i32 to vector<4x128xi32>
    %50 = arith.muli %48, %49 : vector<4x128xi32>
    %c16_i32_11 = arith.constant 16 : i32
    %51 = vector.broadcast %c16_i32_11 : i32 to vector<4x128xi32>
    %52 = arith.shrui %50, %51 : vector<4x128xi32>
    %53 = arith.xori %50, %52 : vector<4x128xi32>
    %c9_i32 = arith.constant 9 : i32
    %54 = vector.broadcast %c9_i32 : i32 to vector<4x128xi32>
    %55 = arith.shrui %34, %54 : vector<4x128xi32>
    %c1065353216_i32 = arith.constant 1065353216 : i32
    %56 = vector.broadcast %c1065353216_i32 : i32 to vector<4x128xi32>
    %57 = arith.ori %55, %56 : vector<4x128xi32>
    %58 = tpu.bitcast %57 : vector<4x128xi32> -> vector<4x128xf32>
    %cst = arith.constant 1.000000e+00 : f32
    %59 = vector.broadcast %cst : f32 to vector<4x128xf32>
    %60 = arith.subf %58, %59 : vector<4x128xf32>
    %c9_i32_12 = arith.constant 9 : i32
    %61 = vector.broadcast %c9_i32_12 : i32 to vector<4x128xi32>
    %62 = arith.shrui %53, %61 : vector<4x128xi32>
    %c1065353216_i32_13 = arith.constant 1065353216 : i32
    %63 = vector.broadcast %c1065353216_i32_13 : i32 to vector<4x128xi32>
    %64 = arith.ori %62, %63 : vector<4x128xi32>
    %65 = tpu.bitcast %64 : vector<4x128xi32> -> vector<4x128xf32>
    %cst_14 = arith.constant 1.000000e+00 : f32
    %66 = vector.broadcast %cst_14 : f32 to vector<4x128xf32>
    %67 = arith.subf %65, %66 : vector<4x128xf32>
    %cst_15 = arith.constant 1.000000e+00 : f32
    %68 = vector.broadcast %cst_15 : f32 to vector<4x128xf32>
    %69 = arith.subf %68, %60 : vector<4x128xf32>
    %70 = math.log %69 : vector<4x128xf32>
    %cst_16 = arith.constant -2.000000e+00 : f32
    %71 = vector.broadcast %cst_16 : f32 to vector<4x128xf32>
    %72 = arith.mulf %71, %70 : vector<4x128xf32>
    %73 = math.sqrt %72 : vector<4x128xf32>
    %cst_17 = arith.constant 6.28318548 : f32
    %74 = vector.broadcast %cst_17 : f32 to vector<4x128xf32>
    %75 = arith.mulf %74, %67 : vector<4x128xf32>
    %76 = math.cos %75 : vector<4x128xf32>
    %77 = arith.mulf %73, %76 : vector<4x128xf32>
    %78 = math.sin %75 : vector<4x128xf32>
    %79 = arith.mulf %73, %78 : vector<4x128xf32>
    %80 = tpu.concatenate %77, %79 in 0 : vector<4x128xf32>, vector<4x128xf32> -> vector<8x128xf32>
    %c0_18 = arith.constant 0 : index
    %c0_19 = arith.constant 0 : index
    %81 = vector.load %arg2[%c0_18, %c0_19] : memref<8x128xf32, #tpu.memory_space<vmem>>, vector<8x128xf32>
    tpu.vector_store %arg2[%c0_18, %c0_19], %80 {strides = array<i32>} : memref<8x128xf32, #tpu.memory_space<vmem>>, vector<8x128xf32>,
    return
  }
  func.func @transform_0(%arg0: i32) -> i32 {
    %c0_i32 = arith.constant 0 : i32
    %c0_i32_0 = arith.constant 0 : i32
    return %c0_i32 : i32
  }
  func.func @transform_1(%arg0: i32) -> (i32, i32) {
    %c0_i32 = arith.constant 0 : i32
    %c0_i32_0 = arith.constant 0 : i32
    return %arg0, %c0_i32 : i32, i32
  }
}

</mosaic_0001>

<llo_original>
// kernel: tpu_custom_call.1
$region0: #{tpu_custom_call.1}
  #allocation0 [shape = 'u32[]', space=smem, size = 0x4, offset = 0x4, fixed_abs, tag = 'smem constant byte address 0x4 - core index']
  #allocation1 [shape = 'u32[144,128]{1,0:T(1,128)}', space=vmem, size = 0x12000, scoped, tag = 'internal scratch']
  #allocation2 [shape = 's32[1]{0:T(128)S(6)}', space=smem, size = 0x200, scoped, tag = 'scoped memory for tpu_custom_call.1']
  %s0 = inlined_call_operand.<no memory space> [shape: s32[1], index: 0, kind: input, shape index: {}]
  %s1 = inlined_call_operand.hbm [shape: f32[8,128], index: 1, kind: output, shape index: {}]
  %s2 = sld [smem:[#allocation0]]
  $region14: #{tpu_custom_call.1} parent=0
    _
  %s4 = ssub.s32 1, %s2
  %s5 = scalar_select 0, %s4, %s2
  %6 = sst [smem:[#allocation2]] %s0
  $region1: #{tpu_custom_call.1} parent=0
    #allocation3 [shape = 'u8[4096]{0}', space=vmem, size = 0x1000, scoped, tag = 'output window, operand 0, single buffered']
    #allocation4 [shape = 's32[1]{0}', space=sflag, size = 0x4, scoped, tag = 'scoped memory for tpu_custom_call.1']
    %7 = vsyncpa [#allocation4], 0
    // Predicated region
    $region2: #{tpu_custom_call.1} parent=1 // pred_check
      _
    $region3: #{tpu_custom_call.1} parent=1 // pred_check_branch
      %9 = sbr.rel (0) target = $region5
    $region4: #{tpu_custom_call.1} parent=1 // pred_region
      _
    $region5: #{tpu_custom_call.1} parent=1 // pred_fallthru
      _
    %s10 = sld [smem:[#allocation2]]
    %s11 = sadd.s32 %s10, 2654435769
    %s12 = sshrl.u32 %s11, 16
    %s13 = sxor.u32 %s11, %s12
    %s14 = smul.u32 %s13, 2246822507
    %s15 = sshrl.u32 %s14, 13
    %s16 = sxor.u32 %s14, %s15
    %s17 = smul.u32 %s16, 3266489909
    %s18 = sshrl.u32 %s17, 16
    %s19 = sxor.u32 %s17, %s18
    %v20 = vlaneseq
    %v21 = vshrl.u32 %v20, 7
    %v22 = vlaneseq
    %v23 = vand.u32 %v22, 127
    %s24 = smul.u32 0, 4
    %v25 = vstv %s24
    %v26 = vadd.s32 %v25, %v21
    %v27 = vmul.u32 %v26, 128
    %v28 = vadd.s32 %v27, %v23
    %v29 = vmul.u32 %v28, 2
    %v30 = vstv %s19
    %v31 = vxor.u32 %v29, %v30
    %v32 = vshrl.u32 %v31, 16
    %v33 = vxor.u32 %v31, %v32
    %v34 = vmul.u32 %v33, 2246822507
    %v35 = vshrl.u32 %v34, 13
    %v36 = vxor.u32 %v34, %v35
    %v37 = vmul.u32 %v36, 3266489909
    %v38 = vshrl.u32 %v37, 16
    %v39 = vxor.u32 %v37, %v38
    %v40 = vadd.s32 %v29, 1
    %v41 = vxor.u32 %v40, %v30
    %v42 = vshrl.u32 %v41, 16
    %v43 = vxor.u32 %v41, %v42
    %v44 = vmul.u32 %v43, 2246822507
    %v45 = vshrl.u32 %v44, 13
    %v46 = vxor.u32 %v44, %v45
    %v47 = vmul.u32 %v46, 3266489909
    %v48 = vshrl.u32 %v47, 16
    %v49 = vxor.u32 %v47, %v48
    %v50 = vshrl.u32 %v39, 9
    %v51 = vor.u32 %v50, 1065353216
    %v53 = vsub.f32 %v51, 1.0
    %v54 = vshrl.u32 %v49, 9
    %v55 = vor.u32 %v54, 1065353216
    %v57 = vsub.f32 %v55, 1.0
    %v58 = vsub.f32 1.0, %v53
    %v59 = vlog2.pop %v58
    %v60 = vmul.f32 %v59, 0.6931472
    %v61 = vmul.f32 %v60, -2.0
    %v62 = vrsqrt.pop %v61
    %v63 = vmul.f32 %v61, %v62
    %vm64 = vcmp.eq.f32.partialorder %v61, inf
    %v65 = vsel %vm64, %v61, %v63
    %vm66 = vcmp.eq.f32.partialorder %v61, 0.0
    %v67 = vand.u32 %v61, 2147483648
    %v68 = vsel %vm66, %v67, %v65
    %v69 = vmul.f32 %v57, 6.2831855
    %v70 = vand.u32 2147483647, %v69
    %vm71 = vcmp.le.f32.partialorder %v70, 0.7853982
    %vm72 = vcmp.lt.s32.totalorder %v69, 0
    %v73 = vand.u32 %v69, 2139095040
    %v74 = vshrl.u32 %v73, 23
    %v75 = vsub.s32 %v74, 127
    %v76 = vand.u32 2147483647, %v69
    %v77 = vand.u32 %v76, 8388607
    %v78 = vor.u32 %v77, 8388608
    %v79 = vsub.s32 0, %v78
    %v80 = vadd.s32 %v75, 1
    %vm81 = vcmp.gt.s32.totalorder %v80, 0
    %v82 = vsel %vm81, %v80, 0
    %v83 = vshrl.u32 %v82, 5
    %v84 = vand.u32 %v82, 31
    %v85 = vsub.s32 32, %v84
    %v86 = vshrl.u32 683565275, %v85
    %v87 = vshll.u32 683565275, %v84
    %v88 = vshrl.u32 2475754826, %v85
    %v89 = vor.u32 %v87, %v88
    %v90 = vshll.u32 2475754826, %v84
    %v91 = vshrl.u32 2131351028, %v85
    %v92 = vor.u32 %v90, %v91
    %v93 = vshll.u32 2131351028, %v84
    %v94 = vshrl.u32 2102212464, %v85
    %v95 = vor.u32 %v93, %v94
    %v96 = vshll.u32 2102212464, %v84
    %v97 = vshrl.u32 920167782, %v85
    %v98 = vor.u32 %v96, %v97
    %v99 = vshll.u32 920167782, %v84
    %v100 = vshrl.u32 1326507024, %v85
    %v101 = vor.u32 %v99, %v100
    %vm102 = vcmp.lt.s32.totalorder %v83, 1
    %vm103 = vcmp.lt.s32.totalorder %v83, 2
    %vm104 = vcmp.lt.s32.totalorder %v83, 3
    %vm105 = vcmp.lt.s32.totalorder %v83, 4
    %v106 = vsel %vm102, %v86, %v89
    %v107 = vsel %vm105, %v95, 2102212464
    %v108 = vsel %vm104, %v92, %v107
    %v109 = vsel %vm103, %v106, %v108
    %v110 = vsel %vm102, %v89, %v92
    %v111 = vsel %vm105, %v98, 920167782
    %v112 = vsel %vm104, %v95, %v111
    %v113 = vsel %vm103, %v110, %v112
    %v114 = vsel %vm102, %v92, %v95
    %v115 = vsel %vm105, %v101, 1326507024
    %v116 = vsel %vm104, %v98, %v115
    %v117 = vsel %vm103, %v114, %v116
    %v118 = vshll.u32 %v78, 8
    %v119 = vmul.u32.u64.compose %v118, %v117
    %v120 = vextract.low.u32 %v119
    %v121 = vextract.high.u32 %v119
    %v122 = vmul.u32.u64.compose %v118, %v113
    %v123 = vextract.low.u32 %v122
    %v124 = vextract.high.u32 %v122
    %v125 = vmul.u32 %v118, %v109
    %v126 = vadd.s32 %v121, %v123
    %vm127 = vc.u32 %v121, %v123
    %v128 = vadd.s32 %v124, 1
    %v129 = vsel %vm127, %v128, %v124
    %v130 = vadd.s32 %v125, %v129
    %v131 = vadd.s32 %v130, 536870912
    %v132 = vshrl.u32 %v131, 30
    %v133 = vshll.u32 %v132, 30
    %v134 = vsub.s32 %v130, %v133
    %vm135 = vcmp.lt.s32.totalorder %v134, 0
    %v136 = vsub.s32 0, %v134
    %v137 = vsel %vm135, %v136, %v134
    %v138 = vclz %v137
    %v139 = vsub.s32 %v138, 2
    %vm140 = vcmp.gt.s32.totalorder 0, %v139
    %v141 = vsel %vm140, 0, %v139
    %v142 = vsub.s32 32, %v141
    %v143 = vshll.u32 %v134, %v141
    %v144 = vshrl.u32 %v126, %v142
    %v145 = vor.u32 %v143, %v144
    %v146 = vsub.s32 4294967266, %v141
    %v147 = vadd.s32 %v146, 127
    %v148 = vshll.u32 %v147, 23
    %v149 = vor.u32 4788187, %v148
    %v150 = vand.u32 2147483647, %v149
    %v152 = vcvt.s32.f32 %v145
    %v153 = vmul.f32 %v152, %v150
    %v154 = vxor.u32 %v153, 2147483648
    %v155 = vsel %vm72, %v154, %v153
    %v156 = vsub.s32 4, %v132
    %v157 = vsel %vm72, %v156, %v132
    %v158 = vsel %vm71, %v69, %v155
    %v159 = vsel %vm71, 0, %v157
    %v160 = vcosq.f32.pop %v158
    %v161 = vsinq.f32.pop %v158
    %vm162 = vweird.f32 %v69
    %v163 = vand.u32 %v159, 3
    %vm164 = vcmp.lt.s32.totalorder %v163, 2
    %vm165 = vcmp.eq.s32.totalorder %v163, 0
    %v166 = vxor.u32 %v161, 2147483648
    %v167 = vsel %vm165, %v160, %v166
    %vm168 = vcmp.eq.s32.totalorder %v163, 2
    %v169 = vxor.u32 %v160, 2147483648
    %v170 = vsel %vm168, %v169, %v161
    %v171 = vsel %vm164, %v167, %v170
    %v172 = vsel %vm162, nan, %v171
    %v173 = vmul.f32 %v68, %v172
    %v174 = vand.u32 2147483647, %v69
    %vm175 = vcmp.le.f32.partialorder %v174, 0.7853982
    %vm176 = vcmp.lt.s32.totalorder %v69, 0
    %v177 = vand.u32 %v69, 2139095040
    %v178 = vshrl.u32 %v177, 23
    %v179 = vsub.s32 %v178, 127
    %v180 = vand.u32 2147483647, %v69
    %v181 = vand.u32 %v180, 8388607
    %v182 = vor.u32 %v181, 8388608
    %v183 = vsub.s32 0, %v182
    %v184 = vadd.s32 %v179, 1
    %vm185 = vcmp.gt.s32.totalorder %v184, 0
    %v186 = vsel %vm185, %v184, 0
    %v187 = vshrl.u32 %v186, 5
    %v188 = vand.u32 %v186, 31
    %v189 = vsub.s32 32, %v188
    %v190 = vshrl.u32 683565275, %v189
    %v191 = vshll.u32 683565275, %v188
    %v192 = vshrl.u32 2475754826, %v189
    %v193 = vor.u32 %v191, %v192
    %v194 = vshll.u32 2475754826, %v188
    %v195 = vshrl.u32 2131351028, %v189
    %v196 = vor.u32 %v194, %v195
    %v197 = vshll.u32 2131351028, %v188
    %v198 = vshrl.u32 2102212464, %v189
    %v199 = vor.u32 %v197, %v198
    %v200 = vshll.u32 2102212464, %v188
    %v201 = vshrl.u32 920167782, %v189
    %v202 = vor.u32 %v200, %v201
    %v203 = vshll.u32 920167782, %v188
    %v204 = vshrl.u32 1326507024, %v189
    %v205 = vor.u32 %v203, %v204
    %vm206 = vcmp.lt.s32.totalorder %v187, 1
    %vm207 = vcmp.lt.s32.totalorder %v187, 2
    %vm208 = vcmp.lt.s32.totalorder %v187, 3
    %vm209 = vcmp.lt.s32.totalorder %v187, 4
    %v210 = vsel %vm206, %v190, %v193
    %v211 = vsel %vm209, %v199, 2102212464
    %v212 = vsel %vm208, %v196, %v211
    %v213 = vsel %vm207, %v210, %v212
    %v214 = vsel %vm206, %v193, %v196
    %v215 = vsel %vm209, %v202, 920167782
    %v216 = vsel %vm208, %v199, %v215
    %v217 = vsel %vm207, %v214, %v216
    %v218 = vsel %vm206, %v196, %v199
    %v219 = vsel %vm209, %v205, 1326507024
    %v220 = vsel %vm208, %v202, %v219
    %v221 = vsel %vm207, %v218, %v220
    %v222 = vshll.u32 %v182, 8
    %v223 = vmul.u32.u64.compose %v222, %v221
    %v224 = vextract.low.u32 %v223
    %v225 = vextract.high.u32 %v223
    %v226 = vmul.u32.u64.compose %v222, %v217
    %v227 = vextract.low.u32 %v226
    %v228 = vextract.high.u32 %v226
    %v229 = vmul.u32 %v222, %v213
    %v230 = vadd.s32 %v225, %v227
    %vm231 = vc.u32 %v225, %v227
    %v232 = vadd.s32 %v228, 1
    %v233 = vsel %vm231, %v232, %v228
    %v234 = vadd.s32 %v229, %v233
    %v235 = vadd.s32 %v234, 536870912
    %v236 = vshrl.u32 %v235, 30
    %v237 = vshll.u32 %v236, 30
    %v238 = vsub.s32 %v234, %v237
    %vm239 = vcmp.lt.s32.totalorder %v238, 0
    %v240 = vsub.s32 0, %v238
    %v241 = vsel %vm239, %v240, %v238
    %v242 = vclz %v241
    %v243 = vsub.s32 %v242, 2
    %vm244 = vcmp.gt.s32.totalorder 0, %v243
    %v245 = vsel %vm244, 0, %v243
    %v246 = vsub.s32 32, %v245
    %v247 = vshll.u32 %v238, %v245
    %v248 = vshrl.u32 %v230, %v246
    %v249 = vor.u32 %v247, %v248
    %v250 = vsub.s32 4294967266, %v245
    %v251 = vadd.s32 %v250, 127
    %v252 = vshll.u32 %v251, 23
    %v253 = vor.u32 4788187, %v252
    %v254 = vand.u32 2147483647, %v253
    %v256 = vcvt.s32.f32 %v249
    %v257 = vmul.f32 %v256, %v254
    %v258 = vxor.u32 %v257, 2147483648
    %v259 = vsel %vm176, %v258, %v257
    %v260 = vsub.s32 4, %v236
    %v261 = vsel %vm176, %v260, %v236
    %v262 = vsel %vm175, %v69, %v259
    %v263 = vsel %vm175, 0, %v261
    %v264 = vcosq.f32.pop %v262
    %v265 = vsinq.f32.pop %v262
    %vm266 = vweird.f32 %v69
    %v267 = vadd.s32 %v263, 3
    %v268 = vand.u32 %v267, 3
    %vm269 = vcmp.lt.s32.totalorder %v268, 2
    %vm270 = vcmp.eq.s32.totalorder %v268, 0
    %v271 = vxor.u32 %v265, 2147483648
    %v272 = vsel %vm270, %v264, %v271
    %vm273 = vcmp.eq.s32.totalorder %v268, 2
    %v274 = vxor.u32 %v264, 2147483648
    %v275 = vsel %vm273, %v274, %v265
    %v276 = vsel %vm269, %v272, %v275
    %v277 = vsel %vm266, nan, %v276
    %v278 = vmul.f32 %v68, %v277
    %v280 = vrot.slane %v278, 4
    %vm282 = vcmask 1043456
    %v283 = vsel %vm282, %v173, %v280
    %284 = vst [vmem:[#allocation3] sm:$0xff] %v283
    // Predicated region
    $region6: #{tpu_custom_call.1} parent=1 // pred_check
      _
    $region7: #{tpu_custom_call.1} parent=1 // pred_check_branch
      %286 = sbr.rel (0) target = $region9
    $region8: #{tpu_custom_call.1} parent=1 // pred_region
      %s288 = ssub.s32 128, 128
      %289 = vsyncadd [#allocation4], %s288
      %s291 = sshll.u32 [#allocation3], 4
      %s292 = int_to_ptr.vmem [resolvable:$true] %s291
      %294 = dma.vmem_to_hbm [thread:$0]  %s292, 128, %s1, [#allocation4]
    $region9: #{tpu_custom_call.1} parent=1 // pred_fallthru
      _
    // Predicated region
    $region10: #{tpu_custom_call.1} parent=1 // pred_check
      _
    $region11: #{tpu_custom_call.1} parent=1 // pred_check_branch
      %296 = sbr.rel (0) target = $region13
    $region12: #{tpu_custom_call.1} parent=1 // pred_region
      %297 = dma.done [#allocation4], 128
    $region13: #{tpu_custom_call.1} parent=1 // pred_fallthru
      _
    %298 = vsyncpa [#allocation4], 1

</llo_original>
